<compile_context>
chip_gen: v7x
topology: tpu7x:2x2x1
jax: 0.10.0
libtpu: 0.0.40
codegen_flags: <defaults>
</compile_context>

<pallas_src>
import functools

import jax
import jax.numpy as jnp
from jax.experimental import pallas as pl
from jax.experimental.pallas import tpu as pltpu

D_IN = 1280   # nn.Linear(1280, 256)
D_HID = 256
D_OUT = 1     # nn.Linear(256, 1)


def _protein_kernel(x_ref, w1_ref, b1_ref, w2_ref, b2_ref, o_ref, acc_ref,
                    *, ts, seq_len, mask_rows):
    """One (batch, seq-chunk) grid step.

    x_ref  : (1, TS, D_IN)  bf16   streamed embedding tile
    w1_ref : (D_IN, D_HID)  bf16   resident fc1 weight
    b1_ref : (1, D_HID)     f32    resident fc1 bias
    w2_ref : (1, D_HID)     f32    resident fc2 weight (as a row)
    b2_ref : (1, 1)         f32    resident fc2 bias
    o_ref  : (1, 1, 1)      f32    per-batch output block
    acc_ref: (1, D_HID)     f32    per-batch running sum over the sequence
    """
    k = pl.program_id(1)

    @pl.when(k == 0)
    def _():
        acc_ref[...] = jnp.zeros_like(acc_ref)

    # fc1 on the MXU (bf16 in, f32 accumulate) + bias + ReLU on the VPU.
    x = x_ref[0]                                                      # (TS, D_IN)
    h = jnp.dot(x, w1_ref[...], preferred_element_type=jnp.float32)   # (TS, D_HID)
    h = jnp.maximum(h + b1_ref[...], 0.0)

    if mask_rows:
        # Zero out rows that are sequence padding (only traced when padding exists).
        row = k * ts + jax.lax.broadcasted_iota(jnp.int32, (ts, 1), 0)
        h = jnp.where(row < seq_len, h, 0.0)

    # Sequence-sum accumulation (replaces torch.sum(x, dim=1)).
    acc_ref[...] += jnp.sum(h, axis=0, keepdims=True)                 # (1, D_HID)

    @pl.when(k == pl.num_programs(1) - 1)
    def _():
        # fc2 as mul + lane reduce on VPU/XLU (avoids an N=1 MXU matmul).
        val = jnp.sum(acc_ref[...] * w2_ref[...], axis=-1, keepdims=True)  # (1, 1)
        val = val + b2_ref[...]
        o_ref[...] = val.reshape(1, 1, 1).astype(o_ref.dtype)


def protein_model_forward(embedding, w1, b1, w2, b2, *, seq_tile=512):
    """embedding: (B, S, 1280) -> (B, 1) predicted DMS score.

    w1: (1280, 256), b1: (256,), w2: (256, 1), b2: (1,)
    (weights stored fan_in x fan_out, i.e. already transposed vs nn.Linear).
    """
    B, S, D = embedding.shape
    assert D == D_IN

    # Sequence tile: full sequence if it is small, otherwise 512-row chunks
    # (multiple of 8/16 so the bf16 block layout is legal and the MXU M-dim is big).
    ts = S if S <= seq_tile else seq_tile
    num_k = (S + ts - 1) // ts
    s_pad = num_k * ts

    x = embedding.astype(jnp.bfloat16)
    if s_pad != S:
        x = jnp.pad(x, ((0, 0), (0, s_pad - S), (0, 0)))
    w1_bf = w1.astype(jnp.bfloat16)
    b1_2d = b1.reshape(1, D_HID).astype(jnp.float32)
    w2_row = w2.reshape(1, D_HID).astype(jnp.float32)
    b2_2d = b2.reshape(1, 1).astype(jnp.float32)

    kernel = functools.partial(
        _protein_kernel, ts=ts, seq_len=S, mask_rows=(s_pad != S))

    grid_spec = pltpu.PrefetchScalarGridSpec(
        num_scalar_prefetch=0,
        grid=(B, num_k),
        in_specs=[
            # Streamed embedding tile.
            pl.BlockSpec((1, ts, D_IN), lambda b, k: (b, k, 0)),
            # Resident weights / biases (constant block index -> DMA'd once).
            pl.BlockSpec((D_IN, D_HID), lambda b, k: (0, 0)),
            pl.BlockSpec((1, D_HID), lambda b, k: (0, 0)),
            pl.BlockSpec((1, D_HID), lambda b, k: (0, 0)),
            pl.BlockSpec((1, 1), lambda b, k: (0, 0)),
        ],
        # Output block depends only on the batch index -> resident across the
        # reduction axis; written at the last k step.
        out_specs=pl.BlockSpec((1, 1, 1), lambda b, k: (b, 0, 0)),
        scratch_shapes=[pltpu.VMEM((1, D_HID), jnp.float32)],
    )

    out3 = pl.pallas_call(
        kernel,
        out_shape=jax.ShapeDtypeStruct((B, 1, 1), jnp.float32),
        grid_spec=grid_spec,
        compiler_params=pltpu.CompilerParams(
            dimension_semantics=("parallel", "arbitrary")),
    )(x, w1_bf, b1_2d, w2_row, b2_2d)

    return out3.reshape(B, D_OUT)


def _init_linear(key, fan_in, fan_out):
    # Deterministic init mirroring nn.Linear's default U(-1/sqrt(fan_in), 1/sqrt(fan_in)).
    kw, kb = jax.random.split(key)
    bound = 1.0 / (fan_in ** 0.5)
    w = jax.random.uniform(kw, (fan_in, fan_out), jnp.float32, -bound, bound)
    b = jax.random.uniform(kb, (fan_out,), jnp.float32, -bound, bound)
    return w, b


def _reference(embedding, w1, b1, w2, b2):
    # Matches the kernel math: bf16 inputs to fc1, f32 accumulation.
    xb = embedding.astype(jnp.bfloat16).astype(jnp.float32)
    wb = w1.astype(jnp.bfloat16).astype(jnp.float32)
    h = jnp.maximum(xb @ wb + b1, 0.0)
    return h.sum(axis=1) @ w2 + b2


if __name__ == "__main__":
    root = jax.random.PRNGKey(0)
    k_x, k_x2, k_fc1, k_fc2 = jax.random.split(root, 4)

    w1, b1 = _init_linear(k_fc1, D_IN, D_HID)   # fc1: 1280 -> 256
    w2, b2 = _init_linear(k_fc2, D_HID, D_OUT)  # fc2: 256 -> 1

    # Case 1: small demo shape, single seq chunk.
    batch, seq = 2, 8
    embedding = jax.random.normal(k_x, (batch, seq, D_IN), jnp.float32)
    out = jax.block_until_ready(protein_model_forward(embedding, w1, b1, w2, b2))
    ref = _reference(embedding, w1, b1, w2, b2)
    assert out.shape == (batch, 1)
    assert jnp.allclose(out, ref, atol=1e-3, rtol=1e-3)

    # Case 2: exercises the multi-chunk accumulator + padded-row masking path.
    batch2, seq2 = 2, 24
    embedding2 = jax.random.normal(k_x2, (batch2, seq2, D_IN), jnp.float32)
    out2 = jax.block_until_ready(
        protein_model_forward(embedding2, w1, b1, w2, b2, seq_tile=16))
    ref2 = _reference(embedding2, w1, b1, w2, b2)
    assert out2.shape == (batch2, 1)
    assert jnp.allclose(out2, ref2, atol=1e-3, rtol=1e-3)

    print("KERNEL_OK")
</pallas_src>

<mosaic_0001>
module attributes {stable_mosaic.version = 11 : i64} {
  func.func @_protein_kernel(%arg0: i32, %arg1: i32, %arg2: memref<1x8x1280xbf16, #tpu.memory_space<vmem>>, %arg3: memref<1280x256xbf16, #tpu.memory_space<vmem>>, %arg4: memref<1x256xf32, #tpu.memory_space<vmem>>, %arg5: memref<1x256xf32, #tpu.memory_space<vmem>>, %arg6: memref<1x1xf32, #tpu.memory_space<vmem>>, %arg7: memref<1x1x1xf32, #tpu.memory_space<vmem>>, %arg8: memref<1x256xf32, #tpu.memory_space<vmem>>) attributes {dimension_semantics = [#tpu.dimension_semantics<parallel>, #tpu.dimension_semantics<arbitrary>], iteration_bounds = array<i64: 2, 1>, scalar_prefetch = 0 : i64, scratch_operands = 1 : i64, tpu.core_type = #tpu.core_type<tc>, window_params = [{transform_indices = @transform_0, window_bounds = array<i64: 1, 8, 1280>}, {pipeline_mode = #tpu.pipeline_mode<synchronous>, transform_indices = @transform_1, window_bounds = array<i64: 1280, 256>}, {pipeline_mode = #tpu.pipeline_mode<synchronous>, transform_indices = @transform_2, window_bounds = array<i64: 1, 256>}, {pipeline_mode = #tpu.pipeline_mode<synchronous>, transform_indices = @transform_3, window_bounds = array<i64: 1, 256>}, {pipeline_mode = #tpu.pipeline_mode<synchronous>, transform_indices = @transform_4, window_bounds = array<i64: 1, 1>}, {transform_indices = @transform_5, window_bounds = array<i64: 1, 1, 1>}]} {
    %c0_i32 = arith.constant 0 : i32
    %0 = arith.cmpi eq, %arg1, %c0_i32 : i32
    %1 = arith.extui %0 : i1 to i32
    %c0_i32_0 = arith.constant 0 : i32
    %2 = arith.cmpi ne, %1, %c0_i32_0 : i32
    scf.if %2 {
      %cst_15 = arith.constant 0.000000e+00 : f32
      %20 = vector.broadcast %cst_15 : f32 to vector<1x256xf32>
      %c0_16 = arith.constant 0 : index
      %c0_17 = arith.constant 0 : index
      %21 = vector.load %arg8[%c0_16, %c0_17] : memref<1x256xf32, #tpu.memory_space<vmem>>, vector<1x256xf32>
      tpu.vector_store %arg8[%c0_16, %c0_17], %20 {strides = array<i32>} : memref<1x256xf32, #tpu.memory_space<vmem>>, vector<1x256xf32>,
    } else {
    }
    %c0 = arith.constant 0 : index
    %c0_1 = arith.constant 0 : index
    %c0_2 = arith.constant 0 : index
    %3 = vector.load %arg2[%c0, %c0_1, %c0_2] : memref<1x8x1280xbf16, #tpu.memory_space<vmem>>, vector<1x8x1280xbf16>
    %4 = vector.shape_cast %3 : vector<1x8x1280xbf16> to vector<8x1280xbf16>
    %c0_3 = arith.constant 0 : index
    %c0_4 = arith.constant 0 : index
    %5 = vector.load %arg3[%c0_3, %c0_4] : memref<1280x256xbf16, #tpu.memory_space<vmem>>, vector<1280x256xbf16>
    %cst = arith.constant dense<0.000000e+00> : vector<8x256xf32>
    %6 = tpu.matmul %4, %5, %cst {dimension_numbers = #tpu.dot_dimension_numbers<[1], [0], [0], [1], [0, 0, 1, 1], [], []>} : vector<8x1280xbf16>, vector<1280x256xbf16>, vector<8x256xf32> -> vector<8x256xf32>
    %c0_5 = arith.constant 0 : index
    %c0_6 = arith.constant 0 : index
    %7 = vector.load %arg4[%c0_5, %c0_6] : memref<1x256xf32, #tpu.memory_space<vmem>>, vector<1x256xf32>
    %8 = vector.broadcast %7 : vector<1x256xf32> to vector<8x256xf32>
    %9 = arith.addf %6, %8 : vector<8x256xf32>
    %cst_7 = arith.constant 0.000000e+00 : f32
    %10 = vector.broadcast %cst_7 : f32 to vector<8x256xf32>
    %11 = arith.maximumf %9, %10 : vector<8x256xf32>
    %c0_8 = arith.constant 0 : index
    %c0_9 = arith.constant 0 : index
    %12 = vector.load %arg8[%c0_8, %c0_9] : memref<1x256xf32, #tpu.memory_space<vmem>>, vector<1x256xf32>
    %cst_10 = arith.constant dense<0.000000e+00> : vector<256xf32>
    %13 = vector.multi_reduction <add>, %11, %cst_10 [0] : vector<8x256xf32> to vector<256xf32>
    %14 = vector.shape_cast %13 : vector<256xf32> to vector<1x256xf32>
    %15 = arith.addf %12, %14 : vector<1x256xf32>
    %c0_11 = arith.constant 0 : index
    %c0_12 = arith.constant 0 : index
    %16 = vector.load %arg8[%c0_11, %c0_12] : memref<1x256xf32, #tpu.memory_space<vmem>>, vector<1x256xf32>
    tpu.vector_store %arg8[%c0_11, %c0_12], %15 {strides = array<i32>} : memref<1x256xf32, #tpu.memory_space<vmem>>, vector<1x256xf32>,
    %c0_i32_13 = arith.constant 0 : i32
    %17 = arith.cmpi eq, %arg1, %c0_i32_13 : i32
    %18 = arith.extui %17 : i1 to i32
    %c0_i32_14 = arith.constant 0 : i32
    %19 = arith.cmpi ne, %18, %c0_i32_14 : i32
    scf.if %19 {
      %c0_15 = arith.constant 0 : index
      %c0_16 = arith.constant 0 : index
      %20 = vector.load %arg8[%c0_15, %c0_16] : memref<1x256xf32, #tpu.memory_space<vmem>>, vector<1x256xf32>
      %c0_17 = arith.constant 0 : index
      %c0_18 = arith.constant 0 : index
      %21 = vector.load %arg5[%c0_17, %c0_18] : memref<1x256xf32, #tpu.memory_space<vmem>>, vector<1x256xf32>
      %22 = arith.mulf %20, %21 : vector<1x256xf32>
      %cst_19 = arith.constant dense<0.000000e+00> : vector<1xf32>
      %23 = vector.multi_reduction <add>, %22, %cst_19 [1] : vector<1x256xf32> to vector<1xf32>
      %24 = vector.shape_cast %23 : vector<1xf32> to vector<1x1xf32>
      %c0_20 = arith.constant 0 : index
      %c0_21 = arith.constant 0 : index
      %25 = vector.load %arg6[%c0_20, %c0_21] : memref<1x1xf32, #tpu.memory_space<vmem>>, vector<1x1xf32>
      %26 = arith.addf %24, %25 : vector<1x1xf32>
      %27 = vector.shape_cast %26 : vector<1x1xf32> to vector<1x1x1xf32>
      %c0_22 = arith.constant 0 : index
      %c0_23 = arith.constant 0 : index
      %c0_24 = arith.constant 0 : index
      %28 = vector.load %arg7[%c0_22, %c0_23, %c0_24] : memref<1x1x1xf32, #tpu.memory_space<vmem>>, vector<1x1x1xf32>
      tpu.vector_store %arg7[%c0_22, %c0_23, %c0_24], %27 {strides = array<i32>} : memref<1x1x1xf32, #tpu.memory_space<vmem>>, vector<1x1x1xf32>,
    } else {
    }
    return
  }
  func.func @transform_0(%arg0: i32, %arg1: i32) -> (i32, i32, i32) {
    %c0_i32 = arith.constant 0 : i32
    %c0_i32_0 = arith.constant 0 : i32
    return %arg0, %arg1, %c0_i32 : i32, i32, i32
  }
  func.func @transform_1(%arg0: i32, %arg1: i32) -> (i32, i32) {
    %c0_i32 = arith.constant 0 : i32
    %c0_i32_0 = arith.constant 0 : i32
    %c0_i32_1 = arith.constant 0 : i32
    return %c0_i32, %c0_i32_0 : i32, i32
  }
  func.func @transform_2(%arg0: i32, %arg1: i32) -> (i32, i32) {
    %c0_i32 = arith.constant 0 : i32
    %c0_i32_0 = arith.constant 0 : i32
    %c0_i32_1 = arith.constant 0 : i32
    return %c0_i32, %c0_i32_0 : i32, i32
  }
  func.func @transform_3(%arg0: i32, %arg1: i32) -> (i32, i32) {
    %c0_i32 = arith.constant 0 : i32
    %c0_i32_0 = arith.constant 0 : i32
    %c0_i32_1 = arith.constant 0 : i32
    return %c0_i32, %c0_i32_0 : i32, i32
  }
  func.func @transform_4(%arg0: i32, %arg1: i32) -> (i32, i32) {
    %c0_i32 = arith.constant 0 : i32
    %c0_i32_0 = arith.constant 0 : i32
    %c0_i32_1 = arith.constant 0 : i32
    return %c0_i32, %c0_i32_0 : i32, i32
  }
  func.func @transform_5(%arg0: i32, %arg1: i32) -> (i32, i32, i32) {
    %c0_i32 = arith.constant 0 : i32
    %c0_i32_0 = arith.constant 0 : i32
    %c0_i32_1 = arith.constant 0 : i32
    return %arg0, %c0_i32, %c0_i32_0 : i32, i32, i32
  }
}

</mosaic_0001>

<llo_original>
// kernel: tpu_custom_call.1
$region0: #{tpu_custom_call.1}
  #allocation0 [shape = 'u32[]', space=smem, size = 0x4, offset = 0x4, fixed_abs, tag = 'smem constant byte address 0x4 - core index']
  #allocation1 [shape = 'u32[144,128]{1,0:T(1,128)}', space=vmem, size = 0x12000, scoped, tag = 'internal scratch']
  #allocation2 [shape = 'f32[1,256]{1,0:T(1,128)}', space=vmem, size = 0x400, scoped, tag = 'scratch operand']
  #allocation3 [shape = 'f32[1,1]{1,0:T(1,128)S(1)}', space=vmem, size = 0x200, scoped, tag = 'scoped memory for tpu_custom_call.1']
  %s0 = inlined_call_operand.hbm [shape: bf16[2,8,1280], index: 0, kind: input, shape index: {}]
  %s1 = inlined_call_operand.hbm [shape: bf16[1280,256], index: 1, kind: input, shape index: {}]
  %s2 = inlined_call_operand.vmem [shape: f32[1,256], index: 2, kind: input, shape index: {}]
  %s3 = inlined_call_operand.vmem [shape: f32[1,256], index: 3, kind: input, shape index: {}]
  %s4 = inlined_call_operand.<no memory space> [shape: f32[1,1], index: 4, kind: input, shape index: {}]
  %s5 = inlined_call_operand.vmem [shape: f32[2,1,1], index: 5, kind: output, shape index: {}]
  %s6 = sld [smem:[#allocation0]]
  $region69: #{tpu_custom_call.1} parent=0
    _
  %s8 = ssub.s32 1, %s6
  %s9 = scalar_select 0, %s8, %s6
  %v10 = vstv %s4
  %11 = vst [vmem:[#allocation3] sm:$0x1] %v10
  $region1: #{tpu_custom_call.1} parent=0
    #allocation4 [shape = 'u8[40960]{0}', space=vmem, size = 0xa000, scoped, tag = 'input window, operand 0']
    #allocation5 [shape = 's32[2]{0}', space=sflag, size = 0x8, scoped, tag = 'scoped memory for tpu_custom_call.1']
    #allocation6 [shape = 'u8[655360]{0}', space=vmem, size = 0xa0000, scoped, tag = 'input window, operand 1, single buffered']
    #allocation7 [shape = 's32[1]{0}', space=sflag, size = 0x4, scoped, tag = 'scoped memory for tpu_custom_call.1']
    %12 = vsyncpa [#allocation5], 0
    %s13 = scalar_lea.sflag [#allocation5], 1
    %14 = vsyncpa %s13, 0
    %15 = vsyncpa [#allocation7], 0
    loop: start=0, step=1, limit=4
    $region2: #{tpu_custom_call.1} parent=1 // loop_pre_header
      _
    $region3: #{tpu_custom_call.1} parent=1 // loop_header
      %s17 = sphi 0, %s21
      %p18 = scmp.ge.s32.totalorder %s17, 4
      %s24 = sphi 0, %s36
      %s25 = sphi 0, %s32
      %s26 = sphi 0, %s24
      %s27 = sphi 0, %s25
      %s28 = sphi 0, %s26
      %s29 = sphi 0, %s27
      %s41 = sphi 0, %s43
      %s44 = sphi 0, %s41
      %s45 = sphi 0, %s44
      %s61 = sphi 0, %s45
      %s65 = sphi 0, %s65
      %s67 = sphi 0, %s65
      %s68 = sphi 0, %s67
      %s82 = sphi 0, %s68
      %s86 = sphi 0, %s86
      %s88 = sphi 0, %s86
      %s89 = sphi 0, %s88
      %s103 = sphi 0, %s89
      %s107 = sphi 0, %s107
      %s109 = sphi 0, %s107
      %s110 = sphi 0, %s109
      %s124 = sphi 0, %s110
      %s128 = sphi 0, %s128
      %s130 = sphi 0, %s128
      %s131 = sphi 0, %s130
      %s145 = sphi 0, %s131
      %s151 = sphi 0, %s153
      %s154 = sphi 0, %s151
      %s155 = sphi 0, %s154
      %s171 = sphi 0, %s155
    $region4: #{tpu_custom_call.1} parent=1 // loop_header_branch
      %20 = sbr.rel (%p18) target = $region8
    $region5: #{tpu_custom_call.1} parent=1 // loop_body
      %s22 = ssub.s32 %s17, 1
      %s23 = ssub.s32 %s17, 2
      %s30 = sadd.s32 1, %s25
      %p31 = scmp.ge.s32.totalorder %s30, 1
      %s32 = scalar_select %p31, 0, %s30
      %s33 = sadd.s32 1, %s24
      %s34 = scalar_select %p31, %s33, %s24
      %p35 = scmp.ge.s32.totalorder %s34, 2
      %s36 = scalar_select %p35, 0, %s34
      %s37 = ssub.s32 %s24, %s36
      %s38 = ssub.s32 %s25, %s32
      %s39 = sor.u32 %s37, %s38
      %p40 = scmp.eq.s32.totalorder %s39, 0
      %s42 = sadd.s32 %s41, 1
      %s43 = scalar_select %p40, %s41, %s42
      %p46 = pneg %p40
      %p47 = scmp.eq.s32.totalorder %s17, 1
      %p48 = por %p46, %p47
      %p49 = scmp.ne.s32.totalorder %s41, %s44
      %p50 = scmp.eq.s32.totalorder %s17, 0
      %p51 = por %p49, %p50
      %p52 = scmp.ne.s32.totalorder %s41, %s44
      %p53 = scmp.eq.s32.totalorder %s22, 1
      %p54 = por %p52, %p53
      %p55 = scmp.ne.s32.totalorder %s44, %s45
      %p56 = scmp.eq.s32.totalorder %s22, 0
      %p57 = por %p55, %p56
      %p58 = scmp.ne.s32.totalorder %s44, %s45
      %p59 = scmp.eq.s32.totalorder %s23, 1
      %p60 = por %p58, %p59
      %p62 = scmp.ne.s32.totalorder %s45, %s61
      %p63 = scmp.eq.s32.totalorder %s23, 0
      %p64 = por %p62, %p63
      %s66 = sadd.s32 %s65, 1
      %p69 = scmp.eq.s32.totalorder %s17, 1
      %p70 = scmp.ne.s32.totalorder %s65, %s67
      %p71 = scmp.eq.s32.totalorder %s17, 0
      %p72 = por %p70, %p71
      %p73 = scmp.ne.s32.totalorder %s65, %s67
      %p74 = scmp.eq.s32.totalorder %s22, 1
      %p75 = por %p73, %p74
      %p76 = scmp.ne.s32.totalorder %s67, %s68
      %p77 = scmp.eq.s32.totalorder %s22, 0
      %p78 = por %p76, %p77
      %p79 = scmp.ne.s32.totalorder %s67, %s68
      %p80 = scmp.eq.s32.totalorder %s23, 1
      %p81 = por %p79, %p80
      %p83 = scmp.ne.s32.totalorder %s68, %s82
      %p84 = scmp.eq.s32.totalorder %s23, 0
      %p85 = por %p83, %p84
      %s87 = sadd.s32 %s86, 1
      %p90 = scmp.eq.s32.totalorder %s17, 1
      %p91 = scmp.ne.s32.totalorder %s86, %s88
      %p92 = scmp.eq.s32.totalorder %s17, 0
      %p93 = por %p91, %p92
      %p94 = scmp.ne.s32.totalorder %s86, %s88
      %p95 = scmp.eq.s32.totalorder %s22, 1
      %p96 = por %p94, %p95
      %p97 = scmp.ne.s32.totalorder %s88, %s89
      %p98 = scmp.eq.s32.totalorder %s22, 0
      %p99 = por %p97, %p98
      %p100 = scmp.ne.s32.totalorder %s88, %s89
      %p101 = scmp.eq.s32.totalorder %s23, 1
      %p102 = por %p100, %p101
      %p104 = scmp.ne.s32.totalorder %s89, %s103
      %p105 = scmp.eq.s32.totalorder %s23, 0
      %p106 = por %p104, %p105
      %s108 = sadd.s32 %s107, 1
      %p111 = scmp.eq.s32.totalorder %s17, 1
      %p112 = scmp.ne.s32.totalorder %s107, %s109
      %p113 = scmp.eq.s32.totalorder %s17, 0
      %p114 = por %p112, %p113
      %p115 = scmp.ne.s32.totalorder %s107, %s109
      %p116 = scmp.eq.s32.totalorder %s22, 1
      %p117 = por %p115, %p116
      %p118 = scmp.ne.s32.totalorder %s109, %s110
      %p119 = scmp.eq.s32.totalorder %s22, 0
      %p120 = por %p118, %p119
      %p121 = scmp.ne.s32.totalorder %s109, %s110
      %p122 = scmp.eq.s32.totalorder %s23, 1
      %p123 = por %p121, %p122
      %p125 = scmp.ne.s32.totalorder %s110, %s124
      %p126 = scmp.eq.s32.totalorder %s23, 0
      %p127 = por %p125, %p126
      %s129 = sadd.s32 %s128, 1
      %p132 = scmp.eq.s32.totalorder %s17, 1
      %p133 = scmp.ne.s32.totalorder %s128, %s130
      %p134 = scmp.eq.s32.totalorder %s17, 0
      %p135 = por %p133, %p134
      %p136 = scmp.ne.s32.totalorder %s128, %s130
      %p137 = scmp.eq.s32.totalorder %s22, 1
      %p138 = por %p136, %p137
      %p139 = scmp.ne.s32.totalorder %s130, %s131
      %p140 = scmp.eq.s32.totalorder %s22, 0
      %p141 = por %p139, %p140
      %p142 = scmp.ne.s32.totalorder %s130, %s131
      %p143 = scmp.eq.s32.totalorder %s23, 1
      %p144 = por %p142, %p143
      %p146 = scmp.ne.s32.totalorder %s131, %s145
      %p147 = scmp.eq.s32.totalorder %s23, 0
      %p148 = por %p146, %p147
      %s149 = ssub.s32 %s24, %s36
      %p150 = scmp.eq.s32.totalorder %s149, 0
      %s152 = sadd.s32 %s151, 1
      %s153 = scalar_select %p150, %s151, %s152
      %p156 = pneg %p150
      %p157 = scmp.eq.s32.totalorder %s17, 1
      %p158 = por %p156, %p157
      %p159 = scmp.ne.s32.totalorder %s151, %s154
      %p160 = scmp.eq.s32.totalorder %s17, 0
      %p161 = por %p159, %p160
      %p162 = scmp.ne.s32.totalorder %s151, %s154
      %p163 = scmp.eq.s32.totalorder %s22, 1
      %p164 = por %p162, %p163
      %p165 = scmp.ne.s32.totalorder %s154, %s155
      %p166 = scmp.eq.s32.totalorder %s22, 0
      %p167 = por %p165, %p166
      %p168 = scmp.ne.s32.totalorder %s154, %s155
      %p169 = scmp.eq.s32.totalorder %s23, 1
      %p170 = por %p168, %p169
      %p172 = scmp.ne.s32.totalorder %s155, %s171
      %p173 = scmp.eq.s32.totalorder %s23, 0
      %p174 = por %p172, %p173
      %p175 = scmp.le.s32.totalorder 1, %s17
      %p176 = scmp.lt.s32.totalorder %s17, 3
      %p177 = pnand %p175, %p176
      %p178 = pneg %p177
      // Predicated region
      $region9: #{tpu_custom_call.1} parent=5 // pred_check
        _
      $region10: #{tpu_custom_call.1} parent=5 // pred_check_branch
        %180 = sbr.rel (%p177) target = $region12
      $region11: #{tpu_custom_call.1} parent=5 // pred_region
        %s181 = ssub.s32 %s17, 1
        // Predicated region
        $region13: #{tpu_custom_call.1} parent=11 // pred_check
          %p182 = pneg %p78
        $region14: #{tpu_custom_call.1} parent=11 // pred_check_branch
          %184 = sbr.rel (%p182) target = $region16
        $region15: #{tpu_custom_call.1} parent=11 // pred_region
          %s186 = ssub.s32 20480, 20480
          %187 = vsyncadd [#allocation7], %s186
          %s188 = sshll.u32 [#allocation6], 4
          %s189 = int_to_ptr.vmem [resolvable:$true] %s188
          %194 = dma.hbm_to_vmem [thread:$0]  %s1, 20480, %s189, [#allocation7], 128, 128, 8
        $region16: #{tpu_custom_call.1} parent=11 // pred_fallthru
          _
        // Predicated region
        $region17: #{tpu_custom_call.1} parent=11 // pred_check
          %p195 = pneg %p99
        $region18: #{tpu_custom_call.1} parent=11 // pred_check_branch
          %197 = sbr.rel (%p195) target = $region20
        $region19: #{tpu_custom_call.1} parent=11 // pred_region
          _
        $region20: #{tpu_custom_call.1} parent=11 // pred_fallthru
          _
        // Predicated region
        $region21: #{tpu_custom_call.1} parent=11 // pred_check
          %p198 = pneg %p120
        $region22: #{tpu_custom_call.1} parent=11 // pred_check_branch
          %200 = sbr.rel (%p198) target = $region24
        $region23: #{tpu_custom_call.1} parent=11 // pred_region
          _
        $region24: #{tpu_custom_call.1} parent=11 // pred_fallthru
          _
        // Predicated region
        $region25: #{tpu_custom_call.1} parent=11 // pred_check
          %p201 = pneg %p141
        $region26: #{tpu_custom_call.1} parent=11 // pred_check_branch
          %203 = sbr.rel (%p201) target = $region28
        $region27: #{tpu_custom_call.1} parent=11 // pred_region
          _
        $region28: #{tpu_custom_call.1} parent=11 // pred_fallthru
          _
      $region12: #{tpu_custom_call.1} parent=5 // pred_fallthru
        _
      %p204 = scmp.lt.s32.totalorder %s17, 2
      // Predicated region
      $region29: #{tpu_custom_call.1} parent=5 // pred_check
        %p205 = pneg %p204
      $region30: #{tpu_custom_call.1} parent=5 // pred_check_branch
        %207 = sbr.rel (%p205) target = $region32
      $region31: #{tpu_custom_call.1} parent=5 // pred_region
        // Predicated region
        $region33: #{tpu_custom_call.1} parent=31 // pred_check
          %p208 = pneg %p51
        $region34: #{tpu_custom_call.1} parent=31 // pred_check_branch
          %210 = sbr.rel (%p208) target = $region36
        $region35: #{tpu_custom_call.1} parent=31 // pred_region
          %s211 = sand.u32 %s41, 1
          %s212 = scalar_lea.sflag [#allocation5], %s211
          %s213 = sand.u32 %s41, 1
          %s214 = smul.addr %s213, 40
          %s215 = scalar_lea.vmem [#allocation4], %s214
          %s217 = ssub.s32 640, 640
          %218 = vsyncadd %s212, %s217
          %s219 = smul.addr %s25, 10
          %s220 = smul.addr %s24, 10
          %s221 = sadd.s32 %s219, %s220
          %s222 = smul.addr %s221, 64
          %s223 = scalar_lea.hbm %s0, %s222
          %s225 = sshll.u32 %s215, 4
          %s226 = int_to_ptr.vmem [resolvable:$true] %s225
          %228 = dma.hbm_to_vmem [thread:$0]  %s223, 640, %s226, %s212
        $region36: #{tpu_custom_call.1} parent=31 // pred_fallthru
          _
      $region32: #{tpu_custom_call.1} parent=5 // pred_fallthru
        _
      %p229 = scmp.le.s32.totalorder 1, %s17
      %p230 = scmp.lt.s32.totalorder %s17, 3
      %p231 = pnand %p229, %p230
      %p232 = pneg %p231
      // Predicated region
      $region37: #{tpu_custom_call.1} parent=5 // pred_check
        _
      $region38: #{tpu_custom_call.1} parent=5 // pred_check_branch
        %234 = sbr.rel (%p231) target = $region40
      $region39: #{tpu_custom_call.1} parent=5 // pred_region
        %s235 = ssub.s32 %s17, 1
        %s236 = sand.u32 %s44, 1
        %s237 = scalar_lea.sflag [#allocation5], %s236
        %s238 = sand.u32 %s44, 1
        %s239 = smul.addr %s238, 40
        %s240 = scalar_lea.vmem [#allocation4], %s239
        // Predicated region
        $region41: #{tpu_custom_call.1} parent=39 // pred_check
          %p241 = pneg %p57
        $region42: #{tpu_custom_call.1} parent=39 // pred_check_branch
          %243 = sbr.rel (%p241) target = $region44
        $region43: #{tpu_custom_call.1} parent=39 // pred_region
          %244 = dma.done %s237, 640
        $region44: #{tpu_custom_call.1} parent=39 // pred_fallthru
          _
        // Predicated region
        $region45: #{tpu_custom_call.1} parent=39 // pred_check
          %p245 = pneg %p78
        $region46: #{tpu_custom_call.1} parent=39 // pred_check_branch
          %247 = sbr.rel (%p245) target = $region48
        $region47: #{tpu_custom_call.1} parent=39 // pred_region
          %248 = dma.done [#allocation7], 20480
        $region48: #{tpu_custom_call.1} parent=39 // pred_fallthru
          _
        %s249 = sand.u32 %s44, 1
        %s250 = scalar_lea.sflag [#allocation5], %s249
        %s251 = sand.u32 %s44, 1
        %s252 = smul.addr %s251, 40
        %s253 = scalar_lea.vmem [#allocation4], %s252
        %p254 = pneg %p57
        %p255 = pneg %p54
        %p256 = pneg %p78
        %p257 = pneg %p75
        %p258 = pneg %p99
        %p259 = pneg %p96
        %p260 = pneg %p120
        %p261 = pneg %p117
        %p262 = pneg %p141
        %p263 = pneg %p138
        %p264 = pneg %p167
        %p265 = pneg %p164
        %p266 = scmp.lt.s32.totalorder %s26, 1
        %s267 = scalar_select %p266, %s26, 1
        %s268 = scalar_lea.vmem %s5, %s267
        %p269 = scmp.lt.s32.totalorder %s26, 1
        %s270 = scalar_select %p269, %s26, 1
        %s271 = scalar_lea.vmem %s5, %s270
        %p272 = scmp.eq.s32.totalorder %s27, 0
        // Predicated region
        $region49: #{tpu_custom_call.1} parent=39 // pred_check
          %p273 = pneg %p272
        $region50: #{tpu_custom_call.1} parent=39 // pred_check_branch
          %275 = sbr.rel (%p273) target = $region52
        $region51: #{tpu_custom_call.1} parent=39 // pred_region
          %v276 = vlaneseq
          %vm277 = vcmp.ge.s32.totalorder %v276, 0
          %vm278 = vcmp.lt.s32.totalorder %v276, 256
          %vm279 = vmand %vm277, %vm278
          %280 = vst.msk [vmem:[#allocation2] sm:$0x3] %vm279, 0.0
        $region52: #{tpu_custom_call.1} parent=39 // pred_fallthru
          _
        %v281 = vld [vmem:[%s240] sm:$0xff]
        %v282 = vld [vmem:[%s240 + $0x8] sm:$0xff]
        %v283 = vld [vmem:[%s240 + $0x10] sm:$0xff]
        %v284 = vld [vmem:[%s240 + $0x18] sm:$0xff]
        %v285 = vld [vmem:[%s240 + $0x20] sm:$0xff]
        %v286 = vld [vmem:[#allocation6] sm:$0xff]
        %v287 = vld [vmem:[#allocation6 + $0x8] sm:$0xff]
        %v288 = vld [vmem:[#allocation6 + $0x10] sm:$0xff]
        %v289 = vld [vmem:[#allocation6 + $0x18] sm:$0xff]
        %v290 = vld [vmem:[#allocation6 + $0x20] sm:$0xff]
        %v291 = vld [vmem:[#allocation6 + $0x28] sm:$0xff]
        %v292 = vld [vmem:[#allocation6 + $0x30] sm:$0xff]
        %v293 = vld [vmem:[#allocation6 + $0x38] sm:$0xff]
        %v294 = vld [vmem:[#allocation6 + $0x40] sm:$0xff]
        %v295 = vld [vmem:[#allocation6 + $0x48] sm:$0xff]
        %v296 = vld [vmem:[#allocation6 + $0x50] sm:$0xff]
        %v297 = vld [vmem:[#allocation6 + $0x58] sm:$0xff]
        %v298 = vld [vmem:[#allocation6 + $0x60] sm:$0xff]
        %v299 = vld [vmem:[#allocation6 + $0x68] sm:$0xff]
        %v300 = vld [vmem:[#allocation6 + $0x70] sm:$0xff]
        %v301 = vld [vmem:[#allocation6 + $0x78] sm:$0xff]
        %v302 = vld [vmem:[#allocation6 + $0x80] sm:$0xff]
        %v303 = vld [vmem:[#allocation6 + $0x88] sm:$0xff]
        %v304 = vld [vmem:[#allocation6 + $0x90] sm:$0xff]
        %v305 = vld [vmem:[#allocation6 + $0x98] sm:$0xff]
        %v306 = vld [vmem:[#allocation6 + $0xa0] sm:$0xff]
        %v307 = vld [vmem:[#allocation6 + $0xa8] sm:$0xff]
        %v308 = vld [vmem:[#allocation6 + $0xb0] sm:$0xff]
        %v309 = vld [vmem:[#allocation6 + $0xb8] sm:$0xff]
        %v310 = vld [vmem:[#allocation6 + $0xc0] sm:$0xff]
        %v311 = vld [vmem:[#allocation6 + $0xc8] sm:$0xff]
        %v312 = vld [vmem:[#allocation6 + $0xd0] sm:$0xff]
        %v313 = vld [vmem:[#allocation6 + $0xd8] sm:$0xff]
        %v314 = vld [vmem:[#allocation6 + $0xe0] sm:$0xff]
        %v315 = vld [vmem:[#allocation6 + $0xe8] sm:$0xff]
        %v316 = vld [vmem:[#allocation6 + $0xf0] sm:$0xff]
        %v317 = vld [vmem:[#allocation6 + $0xf8] sm:$0xff]
        %v318 = vld [vmem:[#allocation6 + $0x100] sm:$0xff]
        %v319 = vld [vmem:[#allocation6 + $0x108] sm:$0xff]
        %v320 = vld [vmem:[#allocation6 + $0x110] sm:$0xff]
        %v321 = vld [vmem:[#allocation6 + $0x118] sm:$0xff]
        %v322 = vld [vmem:[#allocation6 + $0x120] sm:$0xff]
        %v323 = vld [vmem:[#allocation6 + $0x128] sm:$0xff]
        %v324 = vld [vmem:[#allocation6 + $0x130] sm:$0xff]
        %v325 = vld [vmem:[#allocation6 + $0x138] sm:$0xff]
        %v326 = vld [vmem:[#allocation6 + $0x140] sm:$0xff]
        %v327 = vld [vmem:[#allocation6 + $0x148] sm:$0xff]
        %v328 = vld [vmem:[#allocation6 + $0x150] sm:$0xff]
        %v329 = vld [vmem:[#allocation6 + $0x158] sm:$0xff]
        %v330 = vld [vmem:[#allocation6 + $0x160] sm:$0xff]
        %v331 = vld [vmem:[#allocation6 + $0x168] sm:$0xff]
        %v332 = vld [vmem:[#allocation6 + $0x170] sm:$0xff]
        %v333 = vld [vmem:[#allocation6 + $0x178] sm:$0xff]
        %v334 = vld [vmem:[#allocation6 + $0x180] sm:$0xff]
        %v335 = vld [vmem:[#allocation6 + $0x188] sm:$0xff]
        %v336 = vld [vmem:[#allocation6 + $0x190] sm:$0xff]
        %v337 = vld [vmem:[#allocation6 + $0x198] sm:$0xff]
        %v338 = vld [vmem:[#allocation6 + $0x1a0] sm:$0xff]
        %v339 = vld [vmem:[#allocation6 + $0x1a8] sm:$0xff]
        %v340 = vld [vmem:[#allocation6 + $0x1b0] sm:$0xff]
        %v341 = vld [vmem:[#allocation6 + $0x1b8] sm:$0xff]
        %v342 = vld [vmem:[#allocation6 + $0x1c0] sm:$0xff]
        %v343 = vld [vmem:[#allocation6 + $0x1c8] sm:$0xff]
        %v344 = vld [vmem:[#allocation6 + $0x1d0] sm:$0xff]
        %v345 = vld [vmem:[#allocation6 + $0x1d8] sm:$0xff]
        %v346 = vld [vmem:[#allocation6 + $0x1e0] sm:$0xff]
        %v347 = vld [vmem:[#allocation6 + $0x1e8] sm:$0xff]
        %v348 = vld [vmem:[#allocation6 + $0x1f0] sm:$0xff]
        %v349 = vld [vmem:[#allocation6 + $0x1f8] sm:$0xff]
        %v350 = vld [vmem:[#allocation6 + $0x200] sm:$0xff]
        %v351 = vld [vmem:[#allocation6 + $0x208] sm:$0xff]
        %v352 = vld [vmem:[#allocation6 + $0x210] sm:$0xff]
        %v353 = vld [vmem:[#allocation6 + $0x218] sm:$0xff]
        %v354 = vld [vmem:[#allocation6 + $0x220] sm:$0xff]
        %v355 = vld [vmem:[#allocation6 + $0x228] sm:$0xff]
        %v356 = vld [vmem:[#allocation6 + $0x230] sm:$0xff]
        %v357 = vld [vmem:[#allocation6 + $0x238] sm:$0xff]
        %v358 = vld [vmem:[#allocation6 + $0x240] sm:$0xff]
        %v359 = vld [vmem:[#allocation6 + $0x248] sm:$0xff]
        %v360 = vld [vmem:[#allocation6 + $0x250] sm:$0xff]
        %v361 = vld [vmem:[#allocation6 + $0x258] sm:$0xff]
        %v362 = vld [vmem:[#allocation6 + $0x260] sm:$0xff]
        %v363 = vld [vmem:[#allocation6 + $0x268] sm:$0xff]
        %v364 = vld [vmem:[#allocation6 + $0x270] sm:$0xff]
        %v365 = vld [vmem:[#allocation6 + $0x278] sm:$0xff]
        %v366 = vld [vmem:[#allocation6 + $0x280] sm:$0xff]
        %v367 = vld [vmem:[#allocation6 + $0x288] sm:$0xff]
        %v368 = vld [vmem:[#allocation6 + $0x290] sm:$0xff]
        %v369 = vld [vmem:[#allocation6 + $0x298] sm:$0xff]
        %v370 = vld [vmem:[#allocation6 + $0x2a0] sm:$0xff]
        %v371 = vld [vmem:[#allocation6 + $0x2a8] sm:$0xff]
        %v372 = vld [vmem:[#allocation6 + $0x2b0] sm:$0xff]
        %v373 = vld [vmem:[#allocation6 + $0x2b8] sm:$0xff]
        %v374 = vld [vmem:[#allocation6 + $0x2c0] sm:$0xff]
        %v375 = vld [vmem:[#allocation6 + $0x2c8] sm:$0xff]
        %v376 = vld [vmem:[#allocation6 + $0x2d0] sm:$0xff]
        %v377 = vld [vmem:[#allocation6 + $0x2d8] sm:$0xff]
        %v378 = vld [vmem:[#allocation6 + $0x2e0] sm:$0xff]
        %v379 = vld [vmem:[#allocation6 + $0x2e8] sm:$0xff]
        %v380 = vld [vmem:[#allocation6 + $0x2f0] sm:$0xff]
        %v381 = vld [vmem:[#allocation6 + $0x2f8] sm:$0xff]
        %v382 = vld [vmem:[#allocation6 + $0x300] sm:$0xff]
        %v383 = vld [vmem:[#allocation6 + $0x308] sm:$0xff]
        %v384 = vld [vmem:[#allocation6 + $0x310] sm:$0xff]
        %v385 = vld [vmem:[#allocation6 + $0x318] sm:$0xff]
        %v386 = vld [vmem:[#allocation6 + $0x320] sm:$0xff]
        %v387 = vld [vmem:[#allocation6 + $0x328] sm:$0xff]
        %v388 = vld [vmem:[#allocation6 + $0x330] sm:$0xff]
        %v389 = vld [vmem:[#allocation6 + $0x338] sm:$0xff]
        %v390 = vld [vmem:[#allocation6 + $0x340] sm:$0xff]
        %v391 = vld [vmem:[#allocation6 + $0x348] sm:$0xff]
        %v392 = vld [vmem:[#allocation6 + $0x350] sm:$0xff]
        %v393 = vld [vmem:[#allocation6 + $0x358] sm:$0xff]
        %v394 = vld [vmem:[#allocation6 + $0x360] sm:$0xff]
        %v395 = vld [vmem:[#allocation6 + $0x368] sm:$0xff]
        %v396 = vld [vmem:[#allocation6 + $0x370] sm:$0xff]
        %v397 = vld [vmem:[#allocation6 + $0x378] sm:$0xff]
        %v398 = vld [vmem:[#allocation6 + $0x380] sm:$0xff]
        %v399 = vld [vmem:[#allocation6 + $0x388] sm:$0xff]
        %v400 = vld [vmem:[#allocation6 + $0x390] sm:$0xff]
        %v401 = vld [vmem:[#allocation6 + $0x398] sm:$0xff]
        %v402 = vld [vmem:[#allocation6 + $0x3a0] sm:$0xff]
        %v403 = vld [vmem:[#allocation6 + $0x3a8] sm:$0xff]
        %v404 = vld [vmem:[#allocation6 + $0x3b0] sm:$0xff]
        %v405 = vld [vmem:[#allocation6 + $0x3b8] sm:$0xff]
        %v406 = vld [vmem:[#allocation6 + $0x3c0] sm:$0xff]
        %v407 = vld [vmem:[#allocation6 + $0x3c8] sm:$0xff]
        %v408 = vld [vmem:[#allocation6 + $0x3d0] sm:$0xff]
        %v409 = vld [vmem:[#allocation6 + $0x3d8] sm:$0xff]
        %v410 = vld [vmem:[#allocation6 + $0x3e0] sm:$0xff]
        %v411 = vld [vmem:[#allocation6 + $0x3e8] sm:$0xff]
        %v412 = vld [vmem:[#allocation6 + $0x3f0] sm:$0xff]
        %v413 = vld [vmem:[#allocation6 + $0x3f8] sm:$0xff]
        %v414 = vld [vmem:[#allocation6 + $0x400] sm:$0xff]
        %v415 = vld [vmem:[#allocation6 + $0x408] sm:$0xff]
        %v416 = vld [vmem:[#allocation6 + $0x410] sm:$0xff]
        %v417 = vld [vmem:[#allocation6 + $0x418] sm:$0xff]
        %v418 = vld [vmem:[#allocation6 + $0x420] sm:$0xff]
        %v419 = vld [vmem:[#allocation6 + $0x428] sm:$0xff]
        %v420 = vld [vmem:[#allocation6 + $0x430] sm:$0xff]
        %v421 = vld [vmem:[#allocation6 + $0x438] sm:$0xff]
        %v422 = vld [vmem:[#allocation6 + $0x440] sm:$0xff]
        %v423 = vld [vmem:[#allocation6 + $0x448] sm:$0xff]
        %v424 = vld [vmem:[#allocation6 + $0x450] sm:$0xff]
        %v425 = vld [vmem:[#allocation6 + $0x458] sm:$0xff]
        %v426 = vld [vmem:[#allocation6 + $0x460] sm:$0xff]
        %v427 = vld [vmem:[#allocation6 + $0x468] sm:$0xff]
        %v428 = vld [vmem:[#allocation6 + $0x470] sm:$0xff]
        %v429 = vld [vmem:[#allocation6 + $0x478] sm:$0xff]
        %v430 = vld [vmem:[#allocation6 + $0x480] sm:$0xff]
        %v431 = vld [vmem:[#allocation6 + $0x488] sm:$0xff]
        %v432 = vld [vmem:[#allocation6 + $0x490] sm:$0xff]
        %v433 = vld [vmem:[#allocation6 + $0x498] sm:$0xff]
        %v434 = vld [vmem:[#allocation6 + $0x4a0] sm:$0xff]
        %v435 = vld [vmem:[#allocation6 + $0x4a8] sm:$0xff]
        %v436 = vld [vmem:[#allocation6 + $0x4b0] sm:$0xff]
        %v437 = vld [vmem:[#allocation6 + $0x4b8] sm:$0xff]
        %v438 = vld [vmem:[#allocation6 + $0x4c0] sm:$0xff]
        %v439 = vld [vmem:[#allocation6 + $0x4c8] sm:$0xff]
        %v440 = vld [vmem:[#allocation6 + $0x4d0] sm:$0xff]
        %v441 = vld [vmem:[#allocation6 + $0x4d8] sm:$0xff]
        %v442 = vld [vmem:[#allocation6 + $0x4e0] sm:$0xff]
        %v443 = vld [vmem:[#allocation6 + $0x4e8] sm:$0xff]
        %v444 = vld [vmem:[#allocation6 + $0x4f0] sm:$0xff]
        %v445 = vld [vmem:[#allocation6 + $0x4f8] sm:$0xff]
        %v446 = vld [vmem:[%s2] sm:$0x3]
        %v448 = vlaneseq
        %v449 = vshrl.u32 %v448, 7
        %v450 = vsub.s32 0, %v449
        %v451 = vrot.slane %v446, %v450
        %v452 = vlaneseq
        %v453 = vshrl.u32 %v452, 7
        %v454 = vsub.s32 1, %v453
        %v455 = vrot.slane %v446, %v454
        %v463 = vunpack.c.l.b16 %v281
        %v464 = vunpack.c.h.b16 %v281
        %v465 = vunpack.c.l.b16 %v282
        %v466 = vunpack.c.h.b16 %v282
        %v467 = vunpack.c.l.b16 %v283
        %v468 = vunpack.c.h.b16 %v283
        %v469 = vunpack.c.l.b16 %v284
        %v470 = vunpack.c.h.b16 %v284
        %v471 = vunpack.c.l.b16 %v285
        %v472 = vunpack.c.h.b16 %v285
        %v473 = vpack.c.b16 %v463, %v463
        %v474 = vpack.c.b16 %v464, %v464
        %v475 = vpack.c.b16 %v465, %v465
        %v476 = vpack.c.b16 %v466, %v466
        %v477 = vpack.c.b16 %v467, %v467
        %v478 = vpack.c.b16 %v468, %v468
        %v479 = vpack.c.b16 %v469, %v469
        %v480 = vpack.c.b16 %v470, %v470
        %v481 = vpack.c.b16 %v471, %v471
        %v482 = vpack.c.b16 %v472, %v472
        %v653 = vunpack.c.l.b16 %v286
        %v654 = vunpack.c.h.b16 %v286
        %v655 = vunpack.c.l.b16 %v287
        %v656 = vunpack.c.h.b16 %v287
        %v657 = vunpack.c.l.b16 %v288
        %v658 = vunpack.c.h.b16 %v288
        %v659 = vunpack.c.l.b16 %v289
        %v660 = vunpack.c.h.b16 %v289
        %v661 = vunpack.c.l.b16 %v290
        %v662 = vunpack.c.h.b16 %v290
        %v663 = vunpack.c.l.b16 %v291
        %v664 = vunpack.c.h.b16 %v291
        %v665 = vunpack.c.l.b16 %v292
        %v666 = vunpack.c.h.b16 %v292
        %v667 = vunpack.c.l.b16 %v293
        %v668 = vunpack.c.h.b16 %v293
        %v669 = vunpack.c.l.b16 %v294
        %v670 = vunpack.c.h.b16 %v294
        %v671 = vunpack.c.l.b16 %v295
        %v672 = vunpack.c.h.b16 %v295
        %v673 = vunpack.c.l.b16 %v296
        %v674 = vunpack.c.h.b16 %v296
        %v675 = vunpack.c.l.b16 %v297
        %v676 = vunpack.c.h.b16 %v297
        %v677 = vunpack.c.l.b16 %v298
        %v678 = vunpack.c.h.b16 %v298
        %v679 = vunpack.c.l.b16 %v299
        %v680 = vunpack.c.h.b16 %v299
        %v681 = vunpack.c.l.b16 %v300
        %v682 = vunpack.c.h.b16 %v300
        %v683 = vunpack.c.l.b16 %v301
        %v684 = vunpack.c.h.b16 %v301
        %v685 = vunpack.c.l.b16 %v302
        %v686 = vunpack.c.h.b16 %v302
        %v687 = vunpack.c.l.b16 %v303
        %v688 = vunpack.c.h.b16 %v303
        %v689 = vunpack.c.l.b16 %v304
        %v690 = vunpack.c.h.b16 %v304
        %v691 = vunpack.c.l.b16 %v305
        %v692 = vunpack.c.h.b16 %v305
        %v693 = vunpack.c.l.b16 %v306
        %v694 = vunpack.c.h.b16 %v306
        %v695 = vunpack.c.l.b16 %v307
        %v696 = vunpack.c.h.b16 %v307
        %v697 = vunpack.c.l.b16 %v308
        %v698 = vunpack.c.h.b16 %v308
        %v699 = vunpack.c.l.b16 %v309
        %v700 = vunpack.c.h.b16 %v309
        %v701 = vunpack.c.l.b16 %v310
        %v702 = vunpack.c.h.b16 %v310
        %v703 = vunpack.c.l.b16 %v311
        %v704 = vunpack.c.h.b16 %v311
        %v705 = vunpack.c.l.b16 %v312
        %v706 = vunpack.c.h.b16 %v312
        %v707 = vunpack.c.l.b16 %v313
        %v708 = vunpack.c.h.b16 %v313
        %v709 = vunpack.c.l.b16 %v314
        %v710 = vunpack.c.h.b16 %v314
        %v711 = vunpack.c.l.b16 %v315
        %v712 = vunpack.c.h.b16 %v315
        %v713 = vunpack.c.l.b16 %v316
        %v714 = vunpack.c.h.b16 %v316
        %v715 = vunpack.c.l.b16 %v317
        %v716 = vunpack.c.h.b16 %v317
        %v717 = vunpack.c.l.b16 %v318
        %v718 = vunpack.c.h.b16 %v318
        %v719 = vunpack.c.l.b16 %v319
        %v720 = vunpack.c.h.b16 %v319
        %v721 = vunpack.c.l.b16 %v320
        %v722 = vunpack.c.h.b16 %v320
        %v723 = vunpack.c.l.b16 %v321
        %v724 = vunpack.c.h.b16 %v321
        %v725 = vunpack.c.l.b16 %v322
        %v726 = vunpack.c.h.b16 %v322
        %v727 = vunpack.c.l.b16 %v323
        %v728 = vunpack.c.h.b16 %v323
        %v729 = vunpack.c.l.b16 %v324
        %v730 = vunpack.c.h.b16 %v324
        %v731 = vunpack.c.l.b16 %v325
        %v732 = vunpack.c.h.b16 %v325
        %v733 = vunpack.c.l.b16 %v326
        %v734 = vunpack.c.h.b16 %v326
        %v735 = vunpack.c.l.b16 %v327
        %v736 = vunpack.c.h.b16 %v327
        %v737 = vunpack.c.l.b16 %v328
        %v738 = vunpack.c.h.b16 %v328
        %v739 = vunpack.c.l.b16 %v329
        %v740 = vunpack.c.h.b16 %v329
        %v741 = vunpack.c.l.b16 %v330
        %v742 = vunpack.c.h.b16 %v330
        %v743 = vunpack.c.l.b16 %v331
        %v744 = vunpack.c.h.b16 %v331
        %v745 = vunpack.c.l.b16 %v332
        %v746 = vunpack.c.h.b16 %v332
        %v747 = vunpack.c.l.b16 %v333
        %v748 = vunpack.c.h.b16 %v333
        %v749 = vunpack.c.l.b16 %v334
        %v750 = vunpack.c.h.b16 %v334
        %v751 = vunpack.c.l.b16 %v335
        %v752 = vunpack.c.h.b16 %v335
        %v753 = vunpack.c.l.b16 %v336
        %v754 = vunpack.c.h.b16 %v336
        %v755 = vunpack.c.l.b16 %v337
        %v756 = vunpack.c.h.b16 %v337
        %v757 = vunpack.c.l.b16 %v338
        %v758 = vunpack.c.h.b16 %v338
        %v759 = vunpack.c.l.b16 %v339
        %v760 = vunpack.c.h.b16 %v339
        %v761 = vunpack.c.l.b16 %v340
        %v762 = vunpack.c.h.b16 %v340
        %v763 = vunpack.c.l.b16 %v341
        %v764 = vunpack.c.h.b16 %v341
        %v765 = vunpack.c.l.b16 %v342
        %v766 = vunpack.c.h.b16 %v342
        %v767 = vunpack.c.l.b16 %v343
        %v768 = vunpack.c.h.b16 %v343
        %v769 = vunpack.c.l.b16 %v344
        %v770 = vunpack.c.h.b16 %v344
        %v771 = vunpack.c.l.b16 %v345
        %v772 = vunpack.c.h.b16 %v345
        %v773 = vunpack.c.l.b16 %v346
        %v774 = vunpack.c.h.b16 %v346
        %v775 = vunpack.c.l.b16 %v347
        %v776 = vunpack.c.h.b16 %v347
        %v777 = vunpack.c.l.b16 %v348
        %v778 = vunpack.c.h.b16 %v348
        %v779 = vunpack.c.l.b16 %v349
        %v780 = vunpack.c.h.b16 %v349
        %v781 = vunpack.c.l.b16 %v350
        %v782 = vunpack.c.h.b16 %v350
        %v783 = vunpack.c.l.b16 %v351
        %v784 = vunpack.c.h.b16 %v351
        %v785 = vunpack.c.l.b16 %v352
        %v786 = vunpack.c.h.b16 %v352
        %v787 = vunpack.c.l.b16 %v353
        %v788 = vunpack.c.h.b16 %v353
        %v789 = vunpack.c.l.b16 %v354
        %v790 = vunpack.c.h.b16 %v354
        %v791 = vunpack.c.l.b16 %v355
        %v792 = vunpack.c.h.b16 %v355
        %v793 = vunpack.c.l.b16 %v356
        %v794 = vunpack.c.h.b16 %v356
        %v795 = vunpack.c.l.b16 %v357
        %v796 = vunpack.c.h.b16 %v357
        %v797 = vunpack.c.l.b16 %v358
        %v798 = vunpack.c.h.b16 %v358
        %v799 = vunpack.c.l.b16 %v359
        %v800 = vunpack.c.h.b16 %v359
        %v801 = vunpack.c.l.b16 %v360
        %v802 = vunpack.c.h.b16 %v360
        %v803 = vunpack.c.l.b16 %v361
        %v804 = vunpack.c.h.b16 %v361
        %v805 = vunpack.c.l.b16 %v362
        %v806 = vunpack.c.h.b16 %v362
        %v807 = vunpack.c.l.b16 %v363
        %v808 = vunpack.c.h.b16 %v363
        %v809 = vunpack.c.l.b16 %v364
        %v810 = vunpack.c.h.b16 %v364
        %v811 = vunpack.c.l.b16 %v365
        %v812 = vunpack.c.h.b16 %v365
        %v813 = vunpack.c.l.b16 %v366
        %v814 = vunpack.c.h.b16 %v366
        %v815 = vunpack.c.l.b16 %v367
        %v816 = vunpack.c.h.b16 %v367
        %v817 = vunpack.c.l.b16 %v368
        %v818 = vunpack.c.h.b16 %v368
        %v819 = vunpack.c.l.b16 %v369
        %v820 = vunpack.c.h.b16 %v369
        %v821 = vunpack.c.l.b16 %v370
        %v822 = vunpack.c.h.b16 %v370
        %v823 = vunpack.c.l.b16 %v371
        %v824 = vunpack.c.h.b16 %v371
        %v825 = vunpack.c.l.b16 %v372
        %v826 = vunpack.c.h.b16 %v372
        %v827 = vunpack.c.l.b16 %v373
        %v828 = vunpack.c.h.b16 %v373
        %v829 = vunpack.c.l.b16 %v374
        %v830 = vunpack.c.h.b16 %v374
        %v831 = vunpack.c.l.b16 %v375
        %v832 = vunpack.c.h.b16 %v375
        %v833 = vunpack.c.l.b16 %v376
        %v834 = vunpack.c.h.b16 %v376
        %v835 = vunpack.c.l.b16 %v377
        %v836 = vunpack.c.h.b16 %v377
        %v837 = vunpack.c.l.b16 %v378
        %v838 = vunpack.c.h.b16 %v378
        %v839 = vunpack.c.l.b16 %v379
        %v840 = vunpack.c.h.b16 %v379
        %v841 = vunpack.c.l.b16 %v380
        %v842 = vunpack.c.h.b16 %v380
        %v843 = vunpack.c.l.b16 %v381
        %v844 = vunpack.c.h.b16 %v381
        %v845 = vunpack.c.l.b16 %v382
        %v846 = vunpack.c.h.b16 %v382
        %v847 = vunpack.c.l.b16 %v383
        %v848 = vunpack.c.h.b16 %v383
        %v849 = vunpack.c.l.b16 %v384
        %v850 = vunpack.c.h.b16 %v384
        %v851 = vunpack.c.l.b16 %v385
        %v852 = vunpack.c.h.b16 %v385
        %v853 = vunpack.c.l.b16 %v386
        %v854 = vunpack.c.h.b16 %v386
        %v855 = vunpack.c.l.b16 %v387
        %v856 = vunpack.c.h.b16 %v387
        %v857 = vunpack.c.l.b16 %v388
        %v858 = vunpack.c.h.b16 %v388
        %v859 = vunpack.c.l.b16 %v389
        %v860 = vunpack.c.h.b16 %v389
        %v861 = vunpack.c.l.b16 %v390
        %v862 = vunpack.c.h.b16 %v390
        %v863 = vunpack.c.l.b16 %v391
        %v864 = vunpack.c.h.b16 %v391
        %v865 = vunpack.c.l.b16 %v392
        %v866 = vunpack.c.h.b16 %v392
        %v867 = vunpack.c.l.b16 %v393
        %v868 = vunpack.c.h.b16 %v393
        %v869 = vunpack.c.l.b16 %v394
        %v870 = vunpack.c.h.b16 %v394
        %v871 = vunpack.c.l.b16 %v395
        %v872 = vunpack.c.h.b16 %v395
        %v873 = vunpack.c.l.b16 %v396
        %v874 = vunpack.c.h.b16 %v396
        %v875 = vunpack.c.l.b16 %v397
        %v876 = vunpack.c.h.b16 %v397
        %v877 = vunpack.c.l.b16 %v398
        %v878 = vunpack.c.h.b16 %v398
        %v879 = vunpack.c.l.b16 %v399
        %v880 = vunpack.c.h.b16 %v399
        %v881 = vunpack.c.l.b16 %v400
        %v882 = vunpack.c.h.b16 %v400
        %v883 = vunpack.c.l.b16 %v401
        %v884 = vunpack.c.h.b16 %v401
        %v885 = vunpack.c.l.b16 %v402
        %v886 = vunpack.c.h.b16 %v402
        %v887 = vunpack.c.l.b16 %v403
        %v888 = vunpack.c.h.b16 %v403
        %v889 = vunpack.c.l.b16 %v404
        %v890 = vunpack.c.h.b16 %v404
        %v891 = vunpack.c.l.b16 %v405
        %v892 = vunpack.c.h.b16 %v405
        %v893 = vunpack.c.l.b16 %v406
        %v894 = vunpack.c.h.b16 %v406
        %v895 = vunpack.c.l.b16 %v407
        %v896 = vunpack.c.h.b16 %v407
        %v897 = vunpack.c.l.b16 %v408
        %v898 = vunpack.c.h.b16 %v408
        %v899 = vunpack.c.l.b16 %v409
        %v900 = vunpack.c.h.b16 %v409
        %v901 = vunpack.c.l.b16 %v410
        %v902 = vunpack.c.h.b16 %v410
        %v903 = vunpack.c.l.b16 %v411
        %v904 = vunpack.c.h.b16 %v411
        %v905 = vunpack.c.l.b16 %v412
        %v906 = vunpack.c.h.b16 %v412
        %v907 = vunpack.c.l.b16 %v413
        %v908 = vunpack.c.h.b16 %v413
        %v909 = vunpack.c.l.b16 %v414
        %v910 = vunpack.c.h.b16 %v414
        %v911 = vunpack.c.l.b16 %v415
        %v912 = vunpack.c.h.b16 %v415
        %v913 = vunpack.c.l.b16 %v416
        %v914 = vunpack.c.h.b16 %v416
        %v915 = vunpack.c.l.b16 %v417
        %v916 = vunpack.c.h.b16 %v417
        %v917 = vunpack.c.l.b16 %v418
        %v918 = vunpack.c.h.b16 %v418
        %v919 = vunpack.c.l.b16 %v419
        %v920 = vunpack.c.h.b16 %v419
        %v921 = vunpack.c.l.b16 %v420
        %v922 = vunpack.c.h.b16 %v420
        %v923 = vunpack.c.l.b16 %v421
        %v924 = vunpack.c.h.b16 %v421
        %v925 = vunpack.c.l.b16 %v422
        %v926 = vunpack.c.h.b16 %v422
        %v927 = vunpack.c.l.b16 %v423
        %v928 = vunpack.c.h.b16 %v423
        %v929 = vunpack.c.l.b16 %v424
        %v930 = vunpack.c.h.b16 %v424
        %v931 = vunpack.c.l.b16 %v425
        %v932 = vunpack.c.h.b16 %v425
        %v933 = vunpack.c.l.b16 %v426
        %v934 = vunpack.c.h.b16 %v426
        %v935 = vunpack.c.l.b16 %v427
        %v936 = vunpack.c.h.b16 %v427
        %v937 = vunpack.c.l.b16 %v428
        %v938 = vunpack.c.h.b16 %v428
        %v939 = vunpack.c.l.b16 %v429
        %v940 = vunpack.c.h.b16 %v429
        %v941 = vunpack.c.l.b16 %v430
        %v942 = vunpack.c.h.b16 %v430
        %v943 = vunpack.c.l.b16 %v431
        %v944 = vunpack.c.h.b16 %v431
        %v945 = vunpack.c.l.b16 %v432
        %v946 = vunpack.c.h.b16 %v432
        %v947 = vunpack.c.l.b16 %v433
        %v948 = vunpack.c.h.b16 %v433
        %v949 = vunpack.c.l.b16 %v434
        %v950 = vunpack.c.h.b16 %v434
        %v951 = vunpack.c.l.b16 %v435
        %v952 = vunpack.c.h.b16 %v435
        %v953 = vunpack.c.l.b16 %v436
        %v954 = vunpack.c.h.b16 %v436
        %v955 = vunpack.c.l.b16 %v437
        %v956 = vunpack.c.h.b16 %v437
        %v957 = vunpack.c.l.b16 %v438
        %v958 = vunpack.c.h.b16 %v438
        %v959 = vunpack.c.l.b16 %v439
        %v960 = vunpack.c.h.b16 %v439
        %v961 = vunpack.c.l.b16 %v440
        %v962 = vunpack.c.h.b16 %v440
        %v963 = vunpack.c.l.b16 %v441
        %v964 = vunpack.c.h.b16 %v441
        %v965 = vunpack.c.l.b16 %v442
        %v966 = vunpack.c.h.b16 %v442
        %v967 = vunpack.c.l.b16 %v443
        %v968 = vunpack.c.h.b16 %v443
        %v969 = vunpack.c.l.b16 %v444
        %v970 = vunpack.c.h.b16 %v444
        %v971 = vunpack.c.l.b16 %v445
        %v972 = vunpack.c.h.b16 %v445
        %v973 = vpack.c.b16 %v655, %v653
        %v974 = vpack.c.b16 %v656, %v654
        %v975 = vpack.c.b16 %v659, %v657
        %v976 = vpack.c.b16 %v660, %v658
        %v977 = vpack.c.b16 %v663, %v661
        %v978 = vpack.c.b16 %v664, %v662
        %v979 = vpack.c.b16 %v667, %v665
        %v980 = vpack.c.b16 %v668, %v666
        %v981 = vpack.c.b16 %v671, %v669
        %v982 = vpack.c.b16 %v672, %v670
        %v983 = vpack.c.b16 %v675, %v673
        %v984 = vpack.c.b16 %v676, %v674
        %v985 = vpack.c.b16 %v679, %v677
        %v986 = vpack.c.b16 %v680, %v678
        %v987 = vpack.c.b16 %v683, %v681
        %v988 = vpack.c.b16 %v684, %v682
        %v989 = vpack.c.b16 %v687, %v685
        %v990 = vpack.c.b16 %v688, %v686
        %v991 = vpack.c.b16 %v691, %v689
        %v992 = vpack.c.b16 %v692, %v690
        %v993 = vpack.c.b16 %v695, %v693
        %v994 = vpack.c.b16 %v696, %v694
        %v995 = vpack.c.b16 %v699, %v697
        %v996 = vpack.c.b16 %v700, %v698
        %v997 = vpack.c.b16 %v703, %v701
        %v998 = vpack.c.b16 %v704, %v702
        %v999 = vpack.c.b16 %v707, %v705
        %v1000 = vpack.c.b16 %v708, %v706
        %v1001 = vpack.c.b16 %v711, %v709
        %v1002 = vpack.c.b16 %v712, %v710
        %v1003 = vpack.c.b16 %v715, %v713
        %v1004 = vpack.c.b16 %v716, %v714
        %v1005 = vpack.c.b16 %v719, %v717
        %v1006 = vpack.c.b16 %v720, %v718
        %v1007 = vpack.c.b16 %v723, %v721
        %v1008 = vpack.c.b16 %v724, %v722
        %v1009 = vpack.c.b16 %v727, %v725
        %v1010 = vpack.c.b16 %v728, %v726
        %v1011 = vpack.c.b16 %v731, %v729
        %v1012 = vpack.c.b16 %v732, %v730
        %v1013 = vpack.c.b16 %v735, %v733
        %v1014 = vpack.c.b16 %v736, %v734
        %v1015 = vpack.c.b16 %v739, %v737
        %v1016 = vpack.c.b16 %v740, %v738
        %v1017 = vpack.c.b16 %v743, %v741
        %v1018 = vpack.c.b16 %v744, %v742
        %v1019 = vpack.c.b16 %v747, %v745
        %v1020 = vpack.c.b16 %v748, %v746
        %v1021 = vpack.c.b16 %v751, %v749
        %v1022 = vpack.c.b16 %v752, %v750
        %v1023 = vpack.c.b16 %v755, %v753
        %v1024 = vpack.c.b16 %v756, %v754
        %v1025 = vpack.c.b16 %v759, %v757
        %v1026 = vpack.c.b16 %v760, %v758
        %v1027 = vpack.c.b16 %v763, %v761
        %v1028 = vpack.c.b16 %v764, %v762
        %v1029 = vpack.c.b16 %v767, %v765
        %v1030 = vpack.c.b16 %v768, %v766
        %v1031 = vpack.c.b16 %v771, %v769
        %v1032 = vpack.c.b16 %v772, %v770
        %v1033 = vpack.c.b16 %v775, %v773
        %v1034 = vpack.c.b16 %v776, %v774
        %v1035 = vpack.c.b16 %v779, %v777
        %v1036 = vpack.c.b16 %v780, %v778
        %v1037 = vpack.c.b16 %v783, %v781
        %v1038 = vpack.c.b16 %v784, %v782
        %v1039 = vpack.c.b16 %v787, %v785
        %v1040 = vpack.c.b16 %v788, %v786
        %v1041 = vpack.c.b16 %v791, %v789
        %v1042 = vpack.c.b16 %v792, %v790
        %v1043 = vpack.c.b16 %v795, %v793
        %v1044 = vpack.c.b16 %v796, %v794
        %v1045 = vpack.c.b16 %v799, %v797
        %v1046 = vpack.c.b16 %v800, %v798
        %v1047 = vpack.c.b16 %v803, %v801
        %v1048 = vpack.c.b16 %v804, %v802
        %v1049 = vpack.c.b16 %v807, %v805
        %v1050 = vpack.c.b16 %v808, %v806
        %v1051 = vpack.c.b16 %v811, %v809
        %v1052 = vpack.c.b16 %v812, %v810
        %v1053 = vpack.c.b16 %v815, %v813
        %v1054 = vpack.c.b16 %v816, %v814
        %v1055 = vpack.c.b16 %v819, %v817
        %v1056 = vpack.c.b16 %v820, %v818
        %v1057 = vpack.c.b16 %v823, %v821
        %v1058 = vpack.c.b16 %v824, %v822
        %v1059 = vpack.c.b16 %v827, %v825
        %v1060 = vpack.c.b16 %v828, %v826
        %v1061 = vpack.c.b16 %v831, %v829
        %v1062 = vpack.c.b16 %v832, %v830
        %v1063 = vpack.c.b16 %v835, %v833
        %v1064 = vpack.c.b16 %v836, %v834
        %v1065 = vpack.c.b16 %v839, %v837
        %v1066 = vpack.c.b16 %v840, %v838
        %v1067 = vpack.c.b16 %v843, %v841
        %v1068 = vpack.c.b16 %v844, %v842
        %v1069 = vpack.c.b16 %v847, %v845
        %v1070 = vpack.c.b16 %v848, %v846
        %v1071 = vpack.c.b16 %v851, %v849
        %v1072 = vpack.c.b16 %v852, %v850
        %v1073 = vpack.c.b16 %v855, %v853
        %v1074 = vpack.c.b16 %v856, %v854
        %v1075 = vpack.c.b16 %v859, %v857
        %v1076 = vpack.c.b16 %v860, %v858
        %v1077 = vpack.c.b16 %v863, %v861
        %v1078 = vpack.c.b16 %v864, %v862
        %v1079 = vpack.c.b16 %v867, %v865
        %v1080 = vpack.c.b16 %v868, %v866
        %v1081 = vpack.c.b16 %v871, %v869
        %v1082 = vpack.c.b16 %v872, %v870
        %v1083 = vpack.c.b16 %v875, %v873
        %v1084 = vpack.c.b16 %v876, %v874
        %v1085 = vpack.c.b16 %v879, %v877
        %v1086 = vpack.c.b16 %v880, %v878
        %v1087 = vpack.c.b16 %v883, %v881
        %v1088 = vpack.c.b16 %v884, %v882
        %v1089 = vpack.c.b16 %v887, %v885
        %v1090 = vpack.c.b16 %v888, %v886
        %v1091 = vpack.c.b16 %v891, %v889
        %v1092 = vpack.c.b16 %v892, %v890
        %v1093 = vpack.c.b16 %v895, %v893
        %v1094 = vpack.c.b16 %v896, %v894
        %v1095 = vpack.c.b16 %v899, %v897
        %v1096 = vpack.c.b16 %v900, %v898
        %v1097 = vpack.c.b16 %v903, %v901
        %v1098 = vpack.c.b16 %v904, %v902
        %v1099 = vpack.c.b16 %v907, %v905
        %v1100 = vpack.c.b16 %v908, %v906
        %v1101 = vpack.c.b16 %v911, %v909
        %v1102 = vpack.c.b16 %v912, %v910
        %v1103 = vpack.c.b16 %v915, %v913
        %v1104 = vpack.c.b16 %v916, %v914
        %v1105 = vpack.c.b16 %v919, %v917
        %v1106 = vpack.c.b16 %v920, %v918
        %v1107 = vpack.c.b16 %v923, %v921
        %v1108 = vpack.c.b16 %v924, %v922
        %v1109 = vpack.c.b16 %v927, %v925
        %v1110 = vpack.c.b16 %v928, %v926
        %v1111 = vpack.c.b16 %v931, %v929
        %v1112 = vpack.c.b16 %v932, %v930
        %v1113 = vpack.c.b16 %v935, %v933
        %v1114 = vpack.c.b16 %v936, %v934
        %v1115 = vpack.c.b16 %v939, %v937
        %v1116 = vpack.c.b16 %v940, %v938
        %v1117 = vpack.c.b16 %v943, %v941
        %v1118 = vpack.c.b16 %v944, %v942
        %v1119 = vpack.c.b16 %v947, %v945
        %v1120 = vpack.c.b16 %v948, %v946
        %v1121 = vpack.c.b16 %v951, %v949
        %v1122 = vpack.c.b16 %v952, %v950
        %v1123 = vpack.c.b16 %v955, %v953
        %v1124 = vpack.c.b16 %v956, %v954
        %v1125 = vpack.c.b16 %v959, %v957
        %v1126 = vpack.c.b16 %v960, %v958
        %v1127 = vpack.c.b16 %v963, %v961
        %v1128 = vpack.c.b16 %v964, %v962
        %v1129 = vpack.c.b16 %v967, %v965
        %v1130 = vpack.c.b16 %v968, %v966
        %v1131 = vpack.c.b16 %v971, %v969
        %v1132 = vpack.c.b16 %v972, %v970
        %1293 = vmatprep.subr.bf16.mxu0 %v974
        %1294 = vmatpush1.bf16.msra.mxu0 %v973
        %1295 = vmatprep.subr.bf16.mxu0 %v976
        %1296 = vmatpush1.bf16.msra.mxu0 %v975
        %1297 = vmatprep.subr.bf16.mxu0 %v978
        %1298 = vmatpush1.bf16.msra.mxu0 %v977
        %1299 = vmatprep.subr.bf16.mxu0 %v980
        %1300 = vmatpush1.bf16.msra.mxu0 %v979
        %1301 = vmatprep.subr.bf16.mxu0 %v982
        %1302 = vmatpush1.bf16.msra.mxu0 %v981
        %1303 = vmatprep.subr.bf16.mxu0 %v984
        %1304 = vmatpush1.bf16.msra.mxu0 %v983
        %1305 = vmatprep.subr.bf16.mxu0 %v986
        %1306 = vmatpush1.bf16.msra.mxu0 %v985
        %1307 = vmatprep.subr.bf16.mxu0 %v988
        %1308 = vmatpush1.bf16.msra.mxu0 %v987
        %1309 = vmatprep.subr.bf16.mxu0 %v990
        %1310 = vmatpush1.bf16.msra.mxu0 %v989
        %1311 = vmatprep.subr.bf16.mxu0 %v992
        %1312 = vmatpush1.bf16.msra.mxu0 %v991
        %1313 = vmatprep.subr.bf16.mxu0 %v994
        %1314 = vmatpush1.bf16.msra.mxu0 %v993
        %1315 = vmatprep.subr.bf16.mxu0 %v996
        %1316 = vmatpush1.bf16.msra.mxu0 %v995
        %1317 = vmatprep.subr.bf16.mxu0 %v998
        %1318 = vmatpush1.bf16.msra.mxu0 %v997
        %1319 = vmatprep.subr.bf16.mxu0 %v1000
        %1320 = vmatpush1.bf16.msra.mxu0 %v999
        %1321 = vmatprep.subr.bf16.mxu0 %v1002
        %1322 = vmatpush1.bf16.msra.mxu0 %v1001
        %1323 = vmatprep.subr.bf16.mxu0 %v1004
        %1324 = vmatpush1.bf16.msra.mxu0 %v1003
        %1325 = vmatprep.mubr.bf16.mxu0 %v474
        %1326 = vmatmul.mubr.bf16.gmra.mrb[0].mxu0 %v473
        %v1327 = vpop.f32.mrb[0].mxu0
        %v1328 = vadd.f32 %v451, %v1327
        %v1329 = vpop.f32.mrb[0].mxu0
        %v1330 = vadd.f32 %v455, %v1329
        %v1331 = vpop.f32.mrb[0].mxu0
        %v1332 = vpop.f32.mrb[0].mxu0
        %1333 = vdwg.mxu0
        %1334 = vmatprep.subr.bf16.mxu0 %v1006
        %1335 = vmatpush1.bf16.msra.mxu0 %v1005
        %1336 = vmatprep.subr.bf16.mxu0 %v1008
        %1337 = vmatpush1.bf16.msra.mxu0 %v1007
        %1338 = vmatprep.subr.bf16.mxu0 %v1010
        %1339 = vmatpush1.bf16.msra.mxu0 %v1009
        %1340 = vmatprep.subr.bf16.mxu0 %v1012
        %1341 = vmatpush1.bf16.msra.mxu0 %v1011
        %1342 = vmatprep.subr.bf16.mxu0 %v1014
        %1343 = vmatpush1.bf16.msra.mxu0 %v1013
        %1344 = vmatprep.subr.bf16.mxu0 %v1016
        %1345 = vmatpush1.bf16.msra.mxu0 %v1015
        %1346 = vmatprep.subr.bf16.mxu0 %v1018
        %1347 = vmatpush1.bf16.msra.mxu0 %v1017
        %1348 = vmatprep.subr.bf16.mxu0 %v1020
        %1349 = vmatpush1.bf16.msra.mxu0 %v1019
        %1350 = vmatprep.subr.bf16.mxu0 %v1022
        %1351 = vmatpush1.bf16.msra.mxu0 %v1021
        %1352 = vmatprep.subr.bf16.mxu0 %v1024
        %1353 = vmatpush1.bf16.msra.mxu0 %v1023
        %1354 = vmatprep.subr.bf16.mxu0 %v1026
        %1355 = vmatpush1.bf16.msra.mxu0 %v1025
        %1356 = vmatprep.subr.bf16.mxu0 %v1028
        %1357 = vmatpush1.bf16.msra.mxu0 %v1027
        %1358 = vmatprep.subr.bf16.mxu0 %v1030
        %1359 = vmatpush1.bf16.msra.mxu0 %v1029
        %1360 = vmatprep.subr.bf16.mxu0 %v1032
        %1361 = vmatpush1.bf16.msra.mxu0 %v1031
        %1362 = vmatprep.subr.bf16.mxu0 %v1034
        %1363 = vmatpush1.bf16.msra.mxu0 %v1033
        %1364 = vmatprep.subr.bf16.mxu0 %v1036
        %1365 = vmatpush1.bf16.msra.mxu0 %v1035
        %1366 = vmatprep.mubr.bf16.mxu0 %v476
        %1367 = vmatmul.mubr.bf16.gmra.mrb[0].mxu0 %v475
        %v1368 = vpop.f32.mrb[0].mxu0
        %v1369 = vadd.f32 %v1328, %v1368
        %v1370 = vpop.f32.mrb[0].mxu0
        %v1371 = vadd.f32 %v1330, %v1370
        %v1372 = vpop.f32.mrb[0].mxu0
        %v1373 = vpop.f32.mrb[0].mxu0
        %1374 = vdwg.mxu0
        %1375 = vmatprep.subr.bf16.mxu0 %v1038
        %1376 = vmatpush1.bf16.msra.mxu0 %v1037
        %1377 = vmatprep.subr.bf16.mxu0 %v1040
        %1378 = vmatpush1.bf16.msra.mxu0 %v1039
        %1379 = vmatprep.subr.bf16.mxu0 %v1042
        %1380 = vmatpush1.bf16.msra.mxu0 %v1041
        %1381 = vmatprep.subr.bf16.mxu0 %v1044
        %1382 = vmatpush1.bf16.msra.mxu0 %v1043
        %1383 = vmatprep.subr.bf16.mxu0 %v1046
        %1384 = vmatpush1.bf16.msra.mxu0 %v1045
        %1385 = vmatprep.subr.bf16.mxu0 %v1048
        %1386 = vmatpush1.bf16.msra.mxu0 %v1047
        %1387 = vmatprep.subr.bf16.mxu0 %v1050
        %1388 = vmatpush1.bf16.msra.mxu0 %v1049
        %1389 = vmatprep.subr.bf16.mxu0 %v1052
        %1390 = vmatpush1.bf16.msra.mxu0 %v1051
        %1391 = vmatprep.subr.bf16.mxu0 %v1054
        %1392 = vmatpush1.bf16.msra.mxu0 %v1053
        %1393 = vmatprep.subr.bf16.mxu0 %v1056
        %1394 = vmatpush1.bf16.msra.mxu0 %v1055
        %1395 = vmatprep.subr.bf16.mxu0 %v1058
        %1396 = vmatpush1.bf16.msra.mxu0 %v1057
        %1397 = vmatprep.subr.bf16.mxu0 %v1060
        %1398 = vmatpush1.bf16.msra.mxu0 %v1059
        %1399 = vmatprep.subr.bf16.mxu0 %v1062
        %1400 = vmatpush1.bf16.msra.mxu0 %v1061
        %1401 = vmatprep.subr.bf16.mxu0 %v1064
        %1402 = vmatpush1.bf16.msra.mxu0 %v1063
        %1403 = vmatprep.subr.bf16.mxu0 %v1066
        %1404 = vmatpush1.bf16.msra.mxu0 %v1065
        %1405 = vmatprep.subr.bf16.mxu0 %v1068
        %1406 = vmatpush1.bf16.msra.mxu0 %v1067
        %1407 = vmatprep.mubr.bf16.mxu0 %v478
        %1408 = vmatmul.mubr.bf16.gmra.mrb[0].mxu0 %v477
        %v1409 = vpop.f32.mrb[0].mxu0
        %v1410 = vadd.f32 %v1369, %v1409
        %v1411 = vpop.f32.mrb[0].mxu0
        %v1412 = vadd.f32 %v1371, %v1411
        %v1413 = vpop.f32.mrb[0].mxu0
        %v1414 = vpop.f32.mrb[0].mxu0
        %1415 = vdwg.mxu0
        %1416 = vmatprep.subr.bf16.mxu0 %v1070
        %1417 = vmatpush1.bf16.msra.mxu0 %v1069
        %1418 = vmatprep.subr.bf16.mxu0 %v1072
        %1419 = vmatpush1.bf16.msra.mxu0 %v1071
        %1420 = vmatprep.subr.bf16.mxu0 %v1074
        %1421 = vmatpush1.bf16.msra.mxu0 %v1073
        %1422 = vmatprep.subr.bf16.mxu0 %v1076
        %1423 = vmatpush1.bf16.msra.mxu0 %v1075
        %1424 = vmatprep.subr.bf16.mxu0 %v1078
        %1425 = vmatpush1.bf16.msra.mxu0 %v1077
        %1426 = vmatprep.subr.bf16.mxu0 %v1080
        %1427 = vmatpush1.bf16.msra.mxu0 %v1079
        %1428 = vmatprep.subr.bf16.mxu0 %v1082
        %1429 = vmatpush1.bf16.msra.mxu0 %v1081
        %1430 = vmatprep.subr.bf16.mxu0 %v1084
        %1431 = vmatpush1.bf16.msra.mxu0 %v1083
        %1432 = vmatprep.subr.bf16.mxu0 %v1086
        %1433 = vmatpush1.bf16.msra.mxu0 %v1085
        %1434 = vmatprep.subr.bf16.mxu0 %v1088
        %1435 = vmatpush1.bf16.msra.mxu0 %v1087
        %1436 = vmatprep.subr.bf16.mxu0 %v1090
        %1437 = vmatpush1.bf16.msra.mxu0 %v1089
        %1438 = vmatprep.subr.bf16.mxu0 %v1092
        %1439 = vmatpush1.bf16.msra.mxu0 %v1091
        %1440 = vmatprep.subr.bf16.mxu0 %v1094
        %1441 = vmatpush1.bf16.msra.mxu0 %v1093
        %1442 = vmatprep.subr.bf16.mxu0 %v1096
        %1443 = vmatpush1.bf16.msra.mxu0 %v1095
        %1444 = vmatprep.subr.bf16.mxu0 %v1098
        %1445 = vmatpush1.bf16.msra.mxu0 %v1097
        %1446 = vmatprep.subr.bf16.mxu0 %v1100
        %1447 = vmatpush1.bf16.msra.mxu0 %v1099
        %1448 = vmatprep.mubr.bf16.mxu0 %v480
        %1449 = vmatmul.mubr.bf16.gmra.mrb[0].mxu0 %v479
        %v1450 = vpop.f32.mrb[0].mxu0
        %v1451 = vadd.f32 %v1410, %v1450
        %v1452 = vpop.f32.mrb[0].mxu0
        %v1453 = vadd.f32 %v1412, %v1452
        %v1454 = vpop.f32.mrb[0].mxu0
        %v1455 = vpop.f32.mrb[0].mxu0
        %1456 = vdwg.mxu0
        %1457 = vmatprep.subr.bf16.mxu0 %v1102
        %1458 = vmatpush1.bf16.msra.mxu0 %v1101
        %1459 = vmatprep.subr.bf16.mxu0 %v1104
        %1460 = vmatpush1.bf16.msra.mxu0 %v1103
        %1461 = vmatprep.subr.bf16.mxu0 %v1106
        %1462 = vmatpush1.bf16.msra.mxu0 %v1105
        %1463 = vmatprep.subr.bf16.mxu0 %v1108
        %1464 = vmatpush1.bf16.msra.mxu0 %v1107
        %1465 = vmatprep.subr.bf16.mxu0 %v1110
        %1466 = vmatpush1.bf16.msra.mxu0 %v1109
        %1467 = vmatprep.subr.bf16.mxu0 %v1112
        %1468 = vmatpush1.bf16.msra.mxu0 %v1111
        %1469 = vmatprep.subr.bf16.mxu0 %v1114
        %1470 = vmatpush1.bf16.msra.mxu0 %v1113
        %1471 = vmatprep.subr.bf16.mxu0 %v1116
        %1472 = vmatpush1.bf16.msra.mxu0 %v1115
        %1473 = vmatprep.subr.bf16.mxu0 %v1118
        %1474 = vmatpush1.bf16.msra.mxu0 %v1117
        %1475 = vmatprep.subr.bf16.mxu0 %v1120
        %1476 = vmatpush1.bf16.msra.mxu0 %v1119
        %1477 = vmatprep.subr.bf16.mxu0 %v1122
        %1478 = vmatpush1.bf16.msra.mxu0 %v1121
        %1479 = vmatprep.subr.bf16.mxu0 %v1124
        %1480 = vmatpush1.bf16.msra.mxu0 %v1123
        %1481 = vmatprep.subr.bf16.mxu0 %v1126
        %1482 = vmatpush1.bf16.msra.mxu0 %v1125
        %1483 = vmatprep.subr.bf16.mxu0 %v1128
        %1484 = vmatpush1.bf16.msra.mxu0 %v1127
        %1485 = vmatprep.subr.bf16.mxu0 %v1130
        %1486 = vmatpush1.bf16.msra.mxu0 %v1129
        %1487 = vmatprep.subr.bf16.mxu0 %v1132
        %1488 = vmatpush1.bf16.msra.mxu0 %v1131
        %1489 = vmatprep.mubr.bf16.mxu0 %v482
        %1490 = vmatmul.mubr.bf16.gmra.mrb[0].mxu0 %v481
        %v1491 = vpop.f32.mrb[0].mxu0
        %v1492 = vadd.f32 %v1451, %v1491
        %v1493 = vpop.f32.mrb[0].mxu0
        %v1494 = vadd.f32 %v1453, %v1493
        %v1495 = vpop.f32.mrb[0].mxu0
        %v1496 = vpop.f32.mrb[0].mxu0
        %1497 = vdwg.mxu0
        %v1498 = vmax.f32 %v1492, 0.0
        %v1499 = vmax.f32 %v1494, 0.0
        %v1500 = vld [vmem:[#allocation2] sm:$0x3]
        %v1501 = vrot.slane %v1498, 4
        %v1502 = vadd.f32 %v1498, %v1501
        %v1503 = vrot.slane %v1502, 2
        %v1504 = vadd.f32 %v1502, %v1503
        %v1505 = vrot.slane %v1504, 1
        %v1506 = vadd.f32 %v1504, %v1505
        %v1507 = vrot.slane %v1499, 4
        %v1508 = vadd.f32 %v1499, %v1507
        %v1509 = vrot.slane %v1508, 2
        %v1510 = vadd.f32 %v1508, %v1509
        %v1511 = vrot.slane %v1510, 1
        %v1512 = vadd.f32 %v1510, %v1511
        %v1515 = vcombine.low %v1506, %v1512
        %v1517 = vunpack.c.l.s4 1966171168
        %v1518 = vunpack.c.0.s8 %v1517
        %v1519 = vlaneseq
        %v1520 = vshrl.u32 %v1519, 7
        %v1521 = vsub.s32 %v1518, %v1520
        %v1522 = vrot.slane %v1515, %v1521
        %v1524 = vunpack.c.l.s4 1966171168
        %v1525 = vunpack.c.0.s8 %v1524
        %v1526 = vlaneseq
        %v1527 = vshrl.u32 %v1526, 7
        %v1528 = vsub.s32 %v1525, %v1527
        %v1529 = vrot.slane %v1522, %v1528
        %v1531 = vadd.f32 %v1500, %v1529
        %v1532 = vlaneseq
        %vm1533 = vcmp.ge.s32.totalorder %v1532, 0
        %vm1534 = vcmp.lt.s32.totalorder %v1532, 256
        %vm1535 = vmand %vm1533, %vm1534
        %1536 = vst.msk [vmem:[#allocation2] sm:$0x3] %vm1535, %v1531
        // Predicated region
        $region53: #{tpu_custom_call.1} parent=39 // pred_check
          %p1537 = pneg %p272
        $region54: #{tpu_custom_call.1} parent=39 // pred_check_branch
          %1539 = sbr.rel (%p1537) target = $region56
        $region55: #{tpu_custom_call.1} parent=39 // pred_region
          %v1540 = vld [vmem:[#allocation2] sm:$0x3]
          %v1541 = vld [vmem:[%s3] sm:$0x3]
          %v1542 = vmul.f32 %v1540, %v1541
          %v1544 = vlaneseq
          %v1545 = vshrl.u32 %v1544, 7
          %v1546 = vsub.s32 0, %v1545
          %v1547 = vrot.slane %v1542, %v1546
          %v1548 = vlaneseq
          %v1549 = vshrl.u32 %v1548, 7
          %v1550 = vsub.s32 1, %v1549
          %v1551 = vrot.slane %v1542, %v1550
          %vm1554 = vcmask 1040384
          %v1555 = vsel %vm1554, %v1547, 0.0
          %v1556 = vsel %vm1554, %v1551, 0.0
          %v1557 = vadd.f32 %v1555, %v1556
          %1558 = vadd.xlane.f32.xlu0 %v1557
          %v1559 = vpop.xlane.xlu0 %1558
          %v1560 = vld [vmem:[#allocation3] sm:$0x1]
          %v1561 = vadd.f32 %v1559, %v1560
          %vm1562 = vcmask 0
          %1563 = vst.msk [vmem:[%s271] sm:$0x1] %vm1562, %v1561
        $region56: #{tpu_custom_call.1} parent=39 // pred_fallthru
          _
        %p1564 = scmp.lt.s32.totalorder %s26, 1
        %s1565 = scalar_select %p1564, %s26, 1
        %s1566 = scalar_lea.vmem %s5, %s1565
        // Predicated region
        $region57: #{tpu_custom_call.1} parent=39 // pred_check
          %p1567 = pneg %p164
        $region58: #{tpu_custom_call.1} parent=39 // pred_check_branch
          %1569 = sbr.rel (%p1567) target = $region60
        $region59: #{tpu_custom_call.1} parent=39 // pred_region
          _
        $region60: #{tpu_custom_call.1} parent=39 // pred_fallthru
          _
      $region40: #{tpu_custom_call.1} parent=5 // pred_fallthru
        _
      %p1570 = scmp.le.s32.totalorder 2, %s17
      // Predicated region
      $region61: #{tpu_custom_call.1} parent=5 // pred_check
        %p1571 = pneg %p1570
      $region62: #{tpu_custom_call.1} parent=5 // pred_check_branch
        %1573 = sbr.rel (%p1571) target = $region64
      $region63: #{tpu_custom_call.1} parent=5 // pred_region
        %s1574 = ssub.s32 %s17, 2
        // Predicated region
        $region65: #{tpu_custom_call.1} parent=63 // pred_check
          %p1575 = pneg %p170
        $region66: #{tpu_custom_call.1} parent=63 // pred_check_branch
          %1577 = sbr.rel (%p1575) target = $region68
        $region67: #{tpu_custom_call.1} parent=63 // pred_region
          %p1578 = scmp.lt.s32.totalorder %s28, 1
          %s1579 = scalar_select %p1578, %s28, 1
          %s1580 = scalar_lea.vmem %s5, %s1579
        $region68: #{tpu_custom_call.1} parent=63 // pred_fallthru
          _
      $region64: #{tpu_custom_call.1} parent=5 // pred_fallthru
        _
    $region6: #{tpu_custom_call.1} parent=1 // loop_footer
      %s21 = sadd.s32 1, %s17
    $region7: #{tpu_custom_call.1} parent=1 // loop_footer_branch
      %16 = sbr.rel target = $region3
    $region8: #{tpu_custom_call.1} parent=1 // loop_exit
      _
    %1581 = vsyncpa [#allocation5], 1
    %s1582 = scalar_lea.sflag [#allocation5], 1
    %1583 = vsyncpa %s1582, 1
    %1584 = vsyncpa [#allocation7], 1

</llo_original>
